<compile_context>
chip_gen: v5e
topology: v5e:2x2
jax: 0.10.0
libtpu: 0.0.40
codegen_flags: <defaults>
</compile_context>

<pallas_src>
import functools

import jax
import jax.numpy as jnp
from jax.experimental import pallas as pl
from jax.experimental.pallas import tpu as pltpu


# ---------------------------------------------------------------------------
# Tiling helper: tile must divide N and respect the (8, 128) layout rule,
# otherwise fall back to the full dimension (always legal).
# ---------------------------------------------------------------------------
def _pick_tile(n, want, align):
    if want >= n or (n % want) != 0 or (want % align) != 0:
        return n
    return want


# ---------------------------------------------------------------------------
# Kernel 1: head-stacked feature projection  feat = x @ W_all  (lane-dense MXU).
# ---------------------------------------------------------------------------
def _proj_kernel(x_ref, w_ref, o_ref):
    o_ref[...] = jnp.dot(
        x_ref[...], w_ref[...], preferred_element_type=jnp.float32
    ).astype(o_ref.dtype)


def _project(x, w_all, block_n=512):
    n, f_in = x.shape
    hf = w_all.shape[1]
    bn = _pick_tile(n, block_n, 8)
    return pl.pallas_call(
        _proj_kernel,
        out_shape=jax.ShapeDtypeStruct((n, hf), jnp.float32),
        grid=(n // bn,),
        in_specs=[
            pl.BlockSpec((bn, f_in), lambda i: (i, 0)),
            pl.BlockSpec((f_in, hf), lambda i: (0, 0)),
        ],
        out_specs=pl.BlockSpec((bn, hf), lambda i: (i, 0)),
        compiler_params=pltpu.CompilerParams(dimension_semantics=("parallel",)),
    )(x, w_all)


# ---------------------------------------------------------------------------
# Kernel 2: tiled masked-softmax attention + aggregation with online softmax.
#   grid = (num_dst_tiles, num_src_tiles); heads looped inside the kernel so the
#   adjacency tile is fetched once per (dst, src) step and reused for all heads.
# ---------------------------------------------------------------------------
def _make_attn_kernel(num_heads, f_out, negative_slope, apply_elu, has_residual):
    def kernel(*refs):
        if has_residual:
            (adj_ref, el_ref, er_ref, feat_ref, bias_ref, res_ref,
             out_ref, m_ref, l_ref, acc_ref) = refs
        else:
            (adj_ref, el_ref, er_ref, feat_ref, bias_ref,
             out_ref, m_ref, l_ref, acc_ref) = refs
            res_ref = None

        s_idx = pl.program_id(1)
        n_src = pl.num_programs(1)

        @pl.when(s_idx == 0)
        def _():
            m_ref[...] = jnp.full_like(m_ref, -1e30)
            l_ref[...] = jnp.zeros_like(l_ref)
            acc_ref[...] = jnp.zeros_like(acc_ref)

        # Adjacency tile (bf16 {0,1}) shared across all heads.
        mask = adj_ref[...] > 0                       # (Td, Ts) bool
        feat_s = feat_ref[...]                        # (Ts, H*F_out) bf16

        for h in range(num_heads):
            sl = slice(h * f_out, (h + 1) * f_out)
            el_h = el_ref[h:h + 1, :]                 # (1, Ts)  source term
            er_h = er_ref[:, h:h + 1]                 # (Td, 1)  destination term

            # e[dst, src] = leaky_relu(er[dst] + el[src]) with adjacency mask.
            e = er_h + el_h                           # (Td, Ts)
            e = jnp.where(e > 0, e, negative_slope * e)
            e = jnp.where(mask, e, -1e30)

            # Online softmax update (masked entries underflow to exactly 0,
            # so no second mask pass is needed).
            m_prev = m_ref[:, h:h + 1]                # (Td, 1)
            m_new = jnp.maximum(m_prev, jnp.max(e, axis=-1, keepdims=True))
            corr = jnp.exp(m_prev - m_new)            # (Td, 1)
            p = jnp.exp(e - m_new)                    # (Td, Ts)

            l_ref[:, h:h + 1] = (
                corr * l_ref[:, h:h + 1] + jnp.sum(p, axis=-1, keepdims=True))
            m_ref[:, h:h + 1] = m_new

            # Unnormalized aggregation on the MXU in bf16 (f32 accumulation).
            acc_ref[:, sl] = corr * acc_ref[:, sl] + jnp.dot(
                p.astype(jnp.bfloat16), feat_s[:, sl],
                preferred_element_type=jnp.float32)

        # Epilogue: normalize once per row (after the matmul), bias / residual /
        # ELU, and write the full lane-dense (Td, H*F_out) output block.
        @pl.when(s_idx == n_src - 1)
        def _():
            # Guard against fully-masked rows (requires self-loops for real use).
            inv_l = pl.reciprocal(jnp.maximum(l_ref[...], 1e-20), approx=True)
            bias_full = bias_ref[...]                 # (1, H*F_out)
            res_full = res_ref[...] if has_residual else None
            for h in range(num_heads):
                sl = slice(h * f_out, (h + 1) * f_out)
                rst = acc_ref[:, sl] * inv_l[:, h:h + 1] + bias_full[:, sl]
                if has_residual:
                    rst = rst + res_full[:, sl]
                if apply_elu:
                    # exp only on the clamped (<= 0) values: no inf side branch.
                    rst = jnp.where(rst > 0, rst,
                                    jnp.exp(jnp.minimum(rst, 0.0)) - 1.0)
                out_ref[:, sl] = rst.astype(out_ref.dtype)

    return kernel


def gat_conv(x, adj, W, a_l, a_r, bias, resval=None, *, negative_slope=0.2,
             apply_elu=True, block_d=256, block_s=512):
    """One GATConv layer.  Returns lane-dense (N, H*F_out) == .flatten(1)."""
    H, F_in, F_out = W.shape
    N = x.shape[0]
    HF = H * F_out
    has_residual = resval is not None

    # 1) Head-stacked projection (one wide MXU matmul).
    w_all = jnp.transpose(W, (1, 0, 2)).reshape(F_in, HF)
    feat = _project(x.astype(jnp.float32), w_all)              # (N, HF) f32

    # 2) Tiny per-head attention-logit halves (O(N*H*F_out)) in XLA glue.
    feat_h = feat.reshape(N, H, F_out)
    el_t = jnp.einsum("nhf,hf->hn", feat_h, a_l.reshape(H, F_out))  # (H, N) src
    er = jnp.einsum("nhf,hf->nh", feat_h, a_r.reshape(H, F_out))    # (N, H) dst
    bias_row = bias.reshape(1, HF)

    feat_b = feat.astype(jnp.bfloat16)                          # MXU rhs, half DMA
    adj_b = adj if adj.dtype == jnp.bfloat16 else adj.astype(jnp.bfloat16)

    # 3) Tiled attention kernel.
    td = _pick_tile(N, block_d, 8)     # dst tile (sublanes)
    ts = _pick_tile(N, block_s, 128)   # src tile (lanes)
    grid = (N // td, N // ts)

    kernel = _make_attn_kernel(H, F_out, negative_slope, apply_elu, has_residual)

    in_specs = [
        pl.BlockSpec((td, ts), lambda d, s: (d, s)),     # adj tile (head-shared)
        pl.BlockSpec((H, ts), lambda d, s: (0, s)),      # el (source term)
        pl.BlockSpec((td, H), lambda d, s: (d, 0)),      # er (destination term)
        pl.BlockSpec((ts, HF), lambda d, s: (s, 0)),     # projected src features
        pl.BlockSpec((1, HF), lambda d, s: (0, 0)),      # bias
    ]
    args = [adj_b, el_t, er, feat_b, bias_row]
    if has_residual:
        in_specs.append(pl.BlockSpec((td, HF), lambda d, s: (d, 0)))
        args.append(resval.astype(jnp.float32))

    flops = 2 * H * N * N * F_out + 8 * H * N * N
    transcendentals = H * N * N + 2 * H * N
    bytes_accessed = (N * N * 2 + N * HF * (2 + 4) + N * H * 8
                      + (N * HF * 4 if has_residual else 0))

    out = pl.pallas_call(
        kernel,
        out_shape=jax.ShapeDtypeStruct((N, HF), jnp.float32),
        grid=grid,
        in_specs=in_specs,
        out_specs=pl.BlockSpec((td, HF), lambda d, s: (d, 0)),
        scratch_shapes=[
            pltpu.VMEM((td, H), jnp.float32),    # running max m
            pltpu.VMEM((td, H), jnp.float32),    # running denom l
            pltpu.VMEM((td, HF), jnp.float32),   # output accumulator
        ],
        compiler_params=pltpu.CompilerParams(
            dimension_semantics=("parallel", "arbitrary")),
        cost_estimate=pl.CostEstimate(flops=flops,
                                      transcendentals=transcendentals,
                                      bytes_accessed=bytes_accessed),
    )(*args)
    return out                                               # (N, H*F_out)


# ---------------------------------------------------------------------------
# Model glue mirroring GAT.__init__ / GAT.forward.
# ---------------------------------------------------------------------------
def make_gat_configs(in_feats, layer_sizes, n_classes, heads, residuals):
    """(F_in, F_out, H, residual, activation) per layer, mirroring GAT.__init__."""
    cfgs = [(in_feats, layer_sizes[0], heads[0], False, True)]
    for i in range(1, len(layer_sizes)):
        cfgs.append((layer_sizes[i - 1] * heads[i - 1], layer_sizes[i],
                     heads[i], residuals[i], True))
    cfgs.append((layer_sizes[-1] * heads[-1], n_classes, 1, False, False))
    return cfgs


def init_gat_params(key, cfgs):
    params = []
    for (f_in, f_out, h, residual, _act) in cfgs:
        key, k_w, k_al, k_ar, k_res = jax.random.split(key, 5)
        p = {
            "W": 0.1 * jax.random.normal(k_w, (h, f_in, f_out), jnp.float32),
            "a_l": 0.1 * jax.random.normal(k_al, (h, 1, f_out), jnp.float32),
            "a_r": 0.1 * jax.random.normal(k_ar, (h, 1, f_out), jnp.float32),
            "bias": jnp.zeros((h, 1, f_out), jnp.float32),
            "res_W": None,
        }
        if residual and f_in != h * f_out:
            p["res_W"] = 0.1 * jax.random.normal(
                k_res, (f_in, h * f_out), jnp.float32)
        params.append(p)
    return params


def gat_forward(params, cfgs, adj, inputs):
    """Mirrors GAT.forward: hidden layers flatten heads, last layer means heads."""
    adj_b = adj.astype(jnp.bfloat16)      # compact {0,1} mask, converted once
    h = inputs
    n_layers = len(cfgs)
    for i, (cfg, p) in enumerate(zip(cfgs, params)):
        f_in, f_out, n_heads, residual, has_act = cfg
        n = h.shape[0]
        if residual:
            # Head-major flattening matches the kernel's (N, H*F_out) layout.
            resval = (h @ p["res_W"]) if p["res_W"] is not None else h
        else:
            resval = None
        out = gat_conv(h, adj_b, p["W"], p["a_l"], p["a_r"], p["bias"],
                       resval=resval, negative_slope=0.2, apply_elu=has_act)
        if i < n_layers - 1:
            h = out                                   # already == .flatten(1)
        else:
            h = out.reshape(n, n_heads, f_out).mean(axis=1)   # .mean(1)
    return h


# Pure-JAX reference (for correctness check only).
def gat_forward_ref(params, cfgs, adj, inputs, negative_slope=0.2):
    h = inputs
    n_layers = len(cfgs)
    for i, (cfg, p) in enumerate(zip(cfgs, params)):
        f_in, f_out, n_heads, residual, has_act = cfg
        n = h.shape[0]
        feat = jnp.einsum("nk,hkf->nhf", h, p["W"])
        el = jnp.einsum("nhf,hf->nh", feat, p["a_l"][:, 0, :])
        er = jnp.einsum("nhf,hf->nh", feat, p["a_r"][:, 0, :])
        e = er[:, None, :] + el[None, :, :]              # (dst, src, h)
        e = jnp.where(e > 0, e, negative_slope * e)
        e = jnp.where(adj[:, :, None] > 0, e, -1e30)
        e = e - jnp.max(e, axis=1, keepdims=True)
        pexp = jnp.where(adj[:, :, None] > 0, jnp.exp(e), 0.0)
        alpha = pexp / jnp.sum(pexp, axis=1, keepdims=True)
        rst = jnp.einsum("dsh,shf->dhf", alpha, feat)
        rst = rst + p["bias"][None, :, 0, :]
        if residual:
            if p["res_W"] is not None:
                rst = rst + (h @ p["res_W"]).reshape(n, n_heads, f_out)
            else:
                rst = rst + h.reshape(n, n_heads, f_out)
        if has_act:
            rst = jnp.where(rst > 0, rst, jnp.exp(jnp.minimum(rst, 0.0)) - 1.0)
        if i < n_layers - 1:
            h = rst.reshape(n, -1)
        else:
            h = rst.mean(axis=1)
    return h


if __name__ == "__main__":
    key = jax.random.PRNGKey(0)
    k_feat, k_adj, k_param = jax.random.split(key, 3)

    # Small synthetic problem: 16 nodes, 8 input features.
    N = 16
    in_feats = 8
    layer_sizes = [8, 8]
    heads = [2, 2]
    residuals = [False, True]
    n_classes = 4

    # Node features.
    x = jax.random.normal(k_feat, (N, in_feats), jnp.float32)

    # Dense adjacency adj[dst, src]; add self-loops so every node has in-degree
    # >= 1 (DGL GATConv would otherwise error on zero-in-degree nodes).
    adj = jax.random.bernoulli(k_adj, p=0.3, shape=(N, N)).astype(jnp.float32)
    adj = jnp.maximum(adj, jnp.eye(N, dtype=jnp.float32))

    cfgs = make_gat_configs(in_feats, layer_sizes, n_classes, heads, residuals)
    params = init_gat_params(k_param, cfgs)

    logits = gat_forward(params, cfgs, adj, x)
    logits = jax.block_until_ready(logits)

    assert logits.shape == (N, n_classes), logits.shape
    assert bool(jnp.all(jnp.isfinite(logits)))

    ref = gat_forward_ref(params, cfgs, adj, x)
    assert bool(jnp.allclose(logits, ref, atol=5e-2, rtol=5e-2)), (
        float(jnp.max(jnp.abs(logits - ref))))

    print("KERNEL_OK")
</pallas_src>

<mosaic_0001>
module attributes {stable_mosaic.version = 11 : i64} {
  func.func @_proj_kernel(%arg0: i32, %arg1: memref<16x8xf32, #tpu.memory_space<vmem>>, %arg2: memref<8x16xf32, #tpu.memory_space<vmem>>, %arg3: memref<16x16xf32, #tpu.memory_space<vmem>>) attributes {dimension_semantics = [#tpu.dimension_semantics<parallel>], iteration_bounds = array<i64: 1>, scalar_prefetch = 0 : i64, scratch_operands = 0 : i64, tpu.core_type = #tpu.core_type<tc>, window_params = [{transform_indices = @transform_0, window_bounds = array<i64: 16, 8>}, {pipeline_mode = #tpu.pipeline_mode<synchronous>, transform_indices = @transform_1, window_bounds = array<i64: 8, 16>}, {transform_indices = @transform_2, window_bounds = array<i64: 16, 16>}]} {
    %c0 = arith.constant 0 : index
    %c0_0 = arith.constant 0 : index
    %0 = vector.load %arg1[%c0, %c0_0] : memref<16x8xf32, #tpu.memory_space<vmem>>, vector<16x8xf32>
    %c0_1 = arith.constant 0 : index
    %c0_2 = arith.constant 0 : index
    %1 = vector.load %arg2[%c0_1, %c0_2] : memref<8x16xf32, #tpu.memory_space<vmem>>, vector<8x16xf32>
    %cst = arith.constant dense<0.000000e+00> : vector<16x16xf32>
    %2 = tpu.matmul %0, %1, %cst {dimension_numbers = #tpu.dot_dimension_numbers<[1], [0], [0], [1], [0, 0, 1, 1], [], []>} : vector<16x8xf32>, vector<8x16xf32>, vector<16x16xf32> -> vector<16x16xf32>
    %c0_3 = arith.constant 0 : index
    %c0_4 = arith.constant 0 : index
    %3 = vector.load %arg3[%c0_3, %c0_4] : memref<16x16xf32, #tpu.memory_space<vmem>>, vector<16x16xf32>
    tpu.vector_store %arg3[%c0_3, %c0_4], %2 {strides = array<i32>} : memref<16x16xf32, #tpu.memory_space<vmem>>, vector<16x16xf32>,
    return
  }
  func.func @transform_0(%arg0: i32) -> (i32, i32) {
    %c0_i32 = arith.constant 0 : i32
    %c0_i32_0 = arith.constant 0 : i32
    return %arg0, %c0_i32 : i32, i32
  }
  func.func @transform_1(%arg0: i32) -> (i32, i32) {
    %c0_i32 = arith.constant 0 : i32
    %c0_i32_0 = arith.constant 0 : i32
    %c0_i32_1 = arith.constant 0 : i32
    return %c0_i32, %c0_i32_0 : i32, i32
  }
  func.func @transform_2(%arg0: i32) -> (i32, i32) {
    %c0_i32 = arith.constant 0 : i32
    %c0_i32_0 = arith.constant 0 : i32
    return %arg0, %c0_i32 : i32, i32
  }
}

</mosaic_0001>

<llo_original>
// kernel: tpu_custom_call.1
$region0: #{tpu_custom_call.1}
  #allocation0 [shape = 'u32[]', space=smem, size = 0x4, offset = 0x4, fixed_abs, tag = 'smem constant byte address 0x4 - core index']
  #allocation1 [shape = 'u32[72,128]{1,0:T(1,128)}', space=vmem, size = 0x9000, scoped, tag = 'internal scratch']
  %s0 = inlined_call_operand.vmem [shape: f32[16,8], index: 0, kind: input, shape index: {}]
  %s1 = inlined_call_operand.vmem [shape: f32[8,16], index: 1, kind: input, shape index: {}]
  %s2 = inlined_call_operand.hbm [shape: f32[16,16], index: 2, kind: output, shape index: {}]
  %s3 = sld [smem:[#allocation0]]
  $region18: #{tpu_custom_call.1} parent=0
    _
  %s5 = ssub.s32 1, %s3
  %s6 = scalar_select 0, %s5, %s3
  $region1: #{tpu_custom_call.1} parent=0
    #allocation2 [shape = 'u8[8192]{0}', space=vmem, size = 0x2000, scoped, tag = 'output window, operand 0, single buffered']
    #allocation3 [shape = 's32[1]{0}', space=sflag, size = 0x4, scoped, tag = 'scoped memory for tpu_custom_call.1']
    %7 = vsyncpa [#allocation3], 0
    // Predicated region
    $region2: #{tpu_custom_call.1} parent=1 // pred_check
      _
    $region3: #{tpu_custom_call.1} parent=1 // pred_check_branch
      %9 = sbr.rel (0) target = $region5
    $region4: #{tpu_custom_call.1} parent=1 // pred_region
      _
    $region5: #{tpu_custom_call.1} parent=1 // pred_fallthru
      _
    // Predicated region
    $region6: #{tpu_custom_call.1} parent=1 // pred_check
      _
    $region7: #{tpu_custom_call.1} parent=1 // pred_check_branch
      %11 = sbr.rel (0) target = $region9
    $region8: #{tpu_custom_call.1} parent=1 // pred_region
      _
    $region9: #{tpu_custom_call.1} parent=1 // pred_fallthru
      _
    %v12 = vld [vmem:[%s0] sm:$0xff]
    %v13 = vld [vmem:[%s0 + $0x8] sm:$0xff]
    %v14 = vld [vmem:[%s1] sm:$0xff]
    %vm15 = vcmask 64512
    %v17 = vsel %vm15, %v12, 0
    %v20 = vsel %vm15, %v13, 0
    %22 = vmatpush.msra.mxu0 0.0
    %23 = vmatpush.msra.mxu0 0.0
    %24 = vmatpush.msra.mxu0 0.0
    %25 = vmatpush.msra.mxu0 0.0
    %26 = vmatpush.msra.mxu0 0.0
    %27 = vmatpush.msra.mxu0 0.0
    %28 = vmatpush.msra.mxu0 0.0
    %29 = vmatpush.msra.mxu0 0.0
    %30 = vmatpush.msra.mxu0 0.0
    %31 = vmatpush.msra.mxu0 0.0
    %32 = vmatpush.msra.mxu0 0.0
    %33 = vmatpush.msra.mxu0 0.0
    %34 = vmatpush.msra.mxu0 0.0
    %35 = vmatpush.msra.mxu0 0.0
    %36 = vmatpush.msra.mxu0 0.0
    %37 = vmatpush.msra.mxu0 %v14
    %38 = vmatmul.f32.gmra.mxu0 %v17
    %v39 = vpop.f32.mrf.mxu0
    %v40 = vadd.f32 0.0, %v39
    %41 = vmatmul.f32.gmra.mxu0 %v20
    %v42 = vpop.f32.mrf.mxu0
    %v43 = vadd.f32 0.0, %v42
    %44 = vdwg.mxu0
    %vm45 = vcmask 130048
    %46 = vst.msk [vmem:[#allocation2] sm:$0xff] %vm45, %v40
    %47 = vst.msk [vmem:[#allocation2 + $0x8] sm:$0xff] %vm45, %v43
    // Predicated region
    $region10: #{tpu_custom_call.1} parent=1 // pred_check
      _
    $region11: #{tpu_custom_call.1} parent=1 // pred_check_branch
      %49 = sbr.rel (0) target = $region13
    $region12: #{tpu_custom_call.1} parent=1 // pred_region
      %51 = vsyncadd [#allocation3], 0
      %s52 = sshll.u32 [#allocation2], 4
      %s53 = int_to_ptr.vmem [resolvable:$true] %s52
      %s54 = sshll.u32 %s2, 4
      %s55 = int_to_ptr.hbm [resolvable:$true] %s54
      %60 = dma.vmem_to_hbm [thread:$0]  %s53, 256, %s55, [#allocation3], 128, 128, 8
    $region13: #{tpu_custom_call.1} parent=1 // pred_fallthru
      _
    // Predicated region
    $region14: #{tpu_custom_call.1} parent=1 // pred_check
      _
    $region15: #{tpu_custom_call.1} parent=1 // pred_check_branch
      %62 = sbr.rel (0) target = $region17
    $region16: #{tpu_custom_call.1} parent=1 // pred_region
      %64 = dma.done [#allocation3], 256
    $region17: #{tpu_custom_call.1} parent=1 // pred_fallthru
      _
    %65 = vsyncpa [#allocation3], 1

</llo_original>
